<compile_context>
chip_gen: v5e
topology: v5e:2x2
jax: 0.10.0
libtpu: 0.0.40
codegen_flags: <defaults>
</compile_context>

<pallas_src>
import functools

import jax
import jax.numpy as jnp
from jax.experimental import pallas as pl
from jax.experimental.pallas import tpu as pltpu


def _round_up(x: int, m: int) -> int:
    return ((x + m - 1) // m) * m


def critic_kernel(s_ref, a_ref, w1s_ref, w1a_ref, b1_ref, w2_ref, b2_ref,
                  w3_ref, b3_ref, o_ref, *, matmul_dtype, transposed_out):
    # s_ref: (bt, Sd), a_ref: (bt, Ad); weights are full VMEM-resident arrays:
    # w1s (Sd, Hp), w1a (Ad, Hp), w2 (Hp, Hp), w3 (Hp, Op); biases (1, *) f32.
    s = s_ref[...].astype(matmul_dtype)
    a = a_ref[...].astype(matmul_dtype)

    # First layer on split weights == Linear(concat([s, a]))  (no concat needed).
    h1 = (jnp.dot(s, w1s_ref[...], preferred_element_type=jnp.float32)
          + jnp.dot(a, w1a_ref[...], preferred_element_type=jnp.float32)
          + b1_ref[...])
    h1 = jnp.maximum(h1, 0.0)                      # f32 elementwise (v5e-safe)

    h2 = jnp.dot(h1.astype(matmul_dtype), w2_ref[...],
                 preferred_element_type=jnp.float32) + b2_ref[...]
    h2 = jnp.maximum(h2, 0.0)

    q = jnp.dot(h2.astype(matmul_dtype), w3_ref[...],
                preferred_element_type=jnp.float32) + b3_ref[...]   # (bt, Op)

    if transposed_out:
        # Narrow head (O < 128): write a lane-dense (O, bt) row instead of the
        # 128-lane zero-padded (bt, Op) tile.  bt is a multiple of 128, so the
        # XLU transpose and the store are both full-tile / unmasked.
        o = o_ref.shape[0]
        o_ref[...] = jnp.transpose(q)[:o, :].astype(o_ref.dtype)
    else:
        o_ref[...] = q.astype(o_ref.dtype)


def pack_params(params, state_dim, *, matmul_dtype=jnp.bfloat16):
    """One-time weight preprocessing (call once per parameter update).

    Splits W1 so the (state, action) concat never materializes, zero-pads the
    hidden / output widths to lane multiples (exact: ReLU(0)=0 and padded rows
    contribute 0), and casts weights to the matmul dtype.  Biases stay f32 so
    bias-add / ReLU run in f32 inside the kernel.
    """
    w1, b1, w2, b2, w3, b3 = params
    din, hidden = w1.shape
    out = w3.shape[1]
    sd = state_dim
    ad = din - sd
    assert ad > 0, "input_size must equal state_dim + action_dim"

    # NOTE: tiny hidden sizes (e.g. H=32) are padded to 128 lanes for the MXU;
    # that wastes padded FLOPs but keeps a single lane-aligned code path.
    hp = _round_up(hidden, 128)
    op = _round_up(out, 128)
    f32 = jnp.float32
    w1 = w1.astype(f32); w2 = w2.astype(f32); w3 = w3.astype(f32)
    b1 = jnp.asarray(b1, f32).reshape(1, -1)
    b2 = jnp.asarray(b2, f32).reshape(1, -1)
    b3 = jnp.asarray(b3, f32).reshape(1, -1)

    w1s = jnp.zeros((sd, hp), f32).at[:, :hidden].set(w1[:sd]).astype(matmul_dtype)
    w1a = jnp.zeros((ad, hp), f32).at[:, :hidden].set(w1[sd:]).astype(matmul_dtype)
    b1p = jnp.zeros((1, hp), f32).at[:, :hidden].set(b1)
    w2p = jnp.zeros((hp, hp), f32).at[:hidden, :hidden].set(w2).astype(matmul_dtype)
    b2p = jnp.zeros((1, hp), f32).at[:, :hidden].set(b2)
    w3p = jnp.zeros((hp, op), f32).at[:hidden, :out].set(w3).astype(matmul_dtype)
    b3p = jnp.zeros((1, op), f32).at[:, :out].set(b3)
    return (w1s, w1a, b1p, w2p, b2p, w3p, b3p)


def critic_forward(state, action, packed_params, *, output_size=1,
                   batch_tile=1024):
    """Q(s, a) -> (B, output_size). Fused 3-layer MLP critic in one pallas_call."""
    w1s, w1a, b1p, w2p, b2p, w3p, b3p = packed_params
    state = state.astype(jnp.float32)
    action = action.astype(jnp.float32)

    B, Sd = state.shape
    _, Ad = action.shape
    assert w1s.shape[0] == Sd and w1a.shape[0] == Ad, "packed params mismatch"
    Hp = w2p.shape[0]
    Op = w3p.shape[1]
    O = output_size
    assert 1 <= O <= Op
    matmul_dtype = w2p.dtype

    # Narrow heads (the usual O=1 critic) use the lane-dense transposed store.
    transposed_out = O < 128

    # Batch tiling: big 128-aligned tiles (amortize ~0.35us/grid-step, keep the
    # output store lane-dense) and an even tile count when the batch is large
    # enough so v7x's two TensorCores split the work.
    nb = -(-B // batch_tile)
    if nb > 1 or B >= 256:
        nb = max(nb, 2)
        nb += nb % 2
    bt = _round_up(-(-B // nb), 128)
    Bp = nb * bt
    if Bp != B:
        state = jnp.pad(state, ((0, Bp - B), (0, 0)))
        action = jnp.pad(action, ((0, Bp - B), (0, 0)))

    # Weights / biases: whole-array, VMEM-resident, fetched once (no per-step
    # DMA, no double-buffer copy).
    resident = pl.BlockSpec(memory_space=pltpu.MemorySpace.VMEM)

    if transposed_out:
        out_shape = jax.ShapeDtypeStruct((O, Bp), jnp.float32)
        out_spec = pl.BlockSpec((O, bt), lambda i: (0, i))
        out_bytes = O * Bp * 4
    else:
        out_shape = jax.ShapeDtypeStruct((Bp, Op), jnp.float32)
        out_spec = pl.BlockSpec((bt, Op), lambda i: (i, 0))
        out_bytes = Op * Bp * 4

    flops = 2 * Bp * ((Sd + Ad) * Hp + Hp * Hp + Hp * Op)
    bytes_accessed = (state.nbytes + action.nbytes
                      + sum(int(x.nbytes) for x in packed_params) + out_bytes)

    out = pl.pallas_call(
        functools.partial(critic_kernel, matmul_dtype=matmul_dtype,
                          transposed_out=transposed_out),
        out_shape=out_shape,
        grid_spec=pltpu.PrefetchScalarGridSpec(
            num_scalar_prefetch=0,
            grid=(nb,),
            in_specs=[
                pl.BlockSpec((bt, Sd), lambda i: (i, 0)),   # state tile
                pl.BlockSpec((bt, Ad), lambda i: (i, 0)),   # action tile
                resident,   # w1_state
                resident,   # w1_action
                resident,   # b1
                resident,   # w2
                resident,   # b2
                resident,   # w3
                resident,   # b3
            ],
            out_specs=out_spec,
        ),
        compiler_params=pltpu.CompilerParams(
            dimension_semantics=("parallel",)),  # v7x: shard batch across 2 TCs
        cost_estimate=pl.CostEstimate(
            flops=flops, transcendentals=0, bytes_accessed=bytes_accessed),
    )(state, action, w1s, w1a, b1p, w2p, b2p, w3p, b3p)

    if transposed_out:
        return out[:, :B].T          # (B, O)
    return out[:B, :O]


def init_params(key, input_size, hidden_size, output_size):
    """Deterministic PyTorch-nn.Linear-style init (uniform +/- 1/sqrt(fan_in))."""
    ks = jax.random.split(key, 6)

    def linear(kw, kb, fan_in, fan_out):
        bound = 1.0 / jnp.sqrt(jnp.float32(fan_in))
        w = jax.random.uniform(kw, (fan_in, fan_out), jnp.float32, -bound, bound)
        b = jax.random.uniform(kb, (1, fan_out), jnp.float32, -bound, bound)
        return w, b

    w1, b1 = linear(ks[0], ks[1], input_size, hidden_size)
    w2, b2 = linear(ks[2], ks[3], hidden_size, hidden_size)
    w3, b3 = linear(ks[4], ks[5], hidden_size, output_size)
    return (w1, b1, w2, b2, w3, b3)


def _reference(state, action, params):
    x = jnp.concatenate([state, action], axis=-1)
    w1, b1, w2, b2, w3, b3 = params
    h1 = jnp.maximum(x @ w1 + b1, 0.0)
    h2 = jnp.maximum(h1 @ w2 + b2, 0.0)
    return h2 @ w3 + b3


if __name__ == "__main__":
    key = jax.random.PRNGKey(0)
    k_state, k_action, k_params, k_state2, k_action2 = jax.random.split(key, 5)

    batch = 2
    state_dim = 8
    action_dim = 4
    hidden_size = 32
    output_size = 1
    input_size = state_dim + action_dim  # BaseCritic(input_size, output_size)

    state = jax.random.normal(k_state, (batch, state_dim), jnp.float32)
    action = jax.random.normal(k_action, (batch, action_dim), jnp.float32)
    params = init_params(k_params, input_size, hidden_size, output_size)
    q_ref = _reference(state, action, params)

    # f32 matmul path (tight check vs. the pure-JAX reference). Weights are
    # packed ONCE and reused across calls (hoisted preprocessing).
    packed_f32 = pack_params(params, state_dim, matmul_dtype=jnp.float32)
    q = critic_forward(state, action, packed_f32, output_size=output_size)
    jax.block_until_ready(q)
    assert q.shape == (batch, output_size)
    assert jnp.allclose(q, q_ref, atol=1e-5, rtol=1e-5)

    # Default bf16-weight path (v5e/v6e/v7x MXU, f32 accumulate); activations
    # are also cast to bf16 before each matmul -> relaxed tolerance.
    packed_bf16 = pack_params(params, state_dim)
    q_bf16 = critic_forward(state, action, packed_bf16, output_size=output_size)
    jax.block_until_ready(q_bf16)
    assert q_bf16.shape == (batch, output_size)
    assert bool(jnp.all(jnp.isfinite(q_bf16)))
    assert jnp.allclose(q_bf16, q_ref, atol=1e-1, rtol=1e-1)

    # Larger batch exercises the multi-tile (even nb for v7x) + padding path.
    big_batch = 300
    state2 = jax.random.normal(k_state2, (big_batch, state_dim), jnp.float32)
    action2 = jax.random.normal(k_action2, (big_batch, action_dim), jnp.float32)
    q2 = critic_forward(state2, action2, packed_f32, output_size=output_size)
    jax.block_until_ready(q2)
    q2_ref = _reference(state2, action2, params)
    assert q2.shape == (big_batch, output_size)
    assert jnp.allclose(q2, q2_ref, atol=1e-4, rtol=1e-4)

    print("KERNEL_OK")
</pallas_src>

<mosaic_0001>
module attributes {stable_mosaic.version = 11 : i64} {
  func.func @critic_kernel(%arg0: i32, %arg1: memref<128x8xf32, #tpu.memory_space<vmem>>, %arg2: memref<128x4xf32, #tpu.memory_space<vmem>>, %arg3: memref<8x128xf32, #tpu.memory_space<vmem>>, %arg4: memref<4x128xf32, #tpu.memory_space<vmem>>, %arg5: memref<1x128xf32, #tpu.memory_space<vmem>>, %arg6: memref<128x128xf32, #tpu.memory_space<vmem>>, %arg7: memref<1x128xf32, #tpu.memory_space<vmem>>, %arg8: memref<128x128xf32, #tpu.memory_space<vmem>>, %arg9: memref<1x128xf32, #tpu.memory_space<vmem>>, %arg10: memref<1x128xf32, #tpu.memory_space<vmem>>) attributes {dimension_semantics = [#tpu.dimension_semantics<parallel>], iteration_bounds = array<i64: 1>, scalar_prefetch = 0 : i64, scratch_operands = 0 : i64, tpu.core_type = #tpu.core_type<tc>, window_params = [{transform_indices = @transform_0, window_bounds = array<i64: 128, 8>}, {transform_indices = @transform_1, window_bounds = array<i64: 128, 4>}, {pipeline_mode = #tpu.pipeline_mode<synchronous>, transform_indices = @transform_2, window_bounds = array<i64: 8, 128>}, {pipeline_mode = #tpu.pipeline_mode<synchronous>, transform_indices = @transform_3, window_bounds = array<i64: 4, 128>}, {pipeline_mode = #tpu.pipeline_mode<synchronous>, transform_indices = @transform_4, window_bounds = array<i64: 1, 128>}, {pipeline_mode = #tpu.pipeline_mode<synchronous>, transform_indices = @transform_5, window_bounds = array<i64: 128, 128>}, {pipeline_mode = #tpu.pipeline_mode<synchronous>, transform_indices = @transform_6, window_bounds = array<i64: 1, 128>}, {pipeline_mode = #tpu.pipeline_mode<synchronous>, transform_indices = @transform_7, window_bounds = array<i64: 128, 128>}, {pipeline_mode = #tpu.pipeline_mode<synchronous>, transform_indices = @transform_8, window_bounds = array<i64: 1, 128>}, {transform_indices = @transform_9, window_bounds = array<i64: 1, 128>}]} {
    %c0 = arith.constant 0 : index
    %c0_0 = arith.constant 0 : index
    %0 = vector.load %arg1[%c0, %c0_0] : memref<128x8xf32, #tpu.memory_space<vmem>>, vector<128x8xf32>
    %c0_1 = arith.constant 0 : index
    %c0_2 = arith.constant 0 : index
    %1 = vector.load %arg2[%c0_1, %c0_2] : memref<128x4xf32, #tpu.memory_space<vmem>>, vector<128x4xf32>
    %c0_3 = arith.constant 0 : index
    %c0_4 = arith.constant 0 : index
    %2 = vector.load %arg3[%c0_3, %c0_4] : memref<8x128xf32, #tpu.memory_space<vmem>>, vector<8x128xf32>
    %cst = arith.constant dense<0.000000e+00> : vector<128x128xf32>
    %3 = tpu.matmul %0, %2, %cst {dimension_numbers = #tpu.dot_dimension_numbers<[1], [0], [0], [1], [0, 0, 1, 1], [], []>} : vector<128x8xf32>, vector<8x128xf32>, vector<128x128xf32> -> vector<128x128xf32>
    %c0_5 = arith.constant 0 : index
    %c0_6 = arith.constant 0 : index
    %4 = vector.load %arg4[%c0_5, %c0_6] : memref<4x128xf32, #tpu.memory_space<vmem>>, vector<4x128xf32>
    %cst_7 = arith.constant dense<0.000000e+00> : vector<128x128xf32>
    %5 = tpu.matmul %1, %4, %cst_7 {dimension_numbers = #tpu.dot_dimension_numbers<[1], [0], [0], [1], [0, 0, 1, 1], [], []>} : vector<128x4xf32>, vector<4x128xf32>, vector<128x128xf32> -> vector<128x128xf32>
    %6 = arith.addf %3, %5 : vector<128x128xf32>
    %c0_8 = arith.constant 0 : index
    %c0_9 = arith.constant 0 : index
    %7 = vector.load %arg5[%c0_8, %c0_9] : memref<1x128xf32, #tpu.memory_space<vmem>>, vector<1x128xf32>
    %8 = vector.broadcast %7 : vector<1x128xf32> to vector<128x128xf32>
    %9 = arith.addf %6, %8 : vector<128x128xf32>
    %cst_10 = arith.constant 0.000000e+00 : f32
    %10 = vector.broadcast %cst_10 : f32 to vector<128x128xf32>
    %11 = arith.maximumf %9, %10 : vector<128x128xf32>
    %c0_11 = arith.constant 0 : index
    %c0_12 = arith.constant 0 : index
    %12 = vector.load %arg6[%c0_11, %c0_12] : memref<128x128xf32, #tpu.memory_space<vmem>>, vector<128x128xf32>
    %cst_13 = arith.constant dense<0.000000e+00> : vector<128x128xf32>
    %13 = tpu.matmul %11, %12, %cst_13 {dimension_numbers = #tpu.dot_dimension_numbers<[1], [0], [0], [1], [0, 0, 1, 1], [], []>} : vector<128x128xf32>, vector<128x128xf32>, vector<128x128xf32> -> vector<128x128xf32>
    %c0_14 = arith.constant 0 : index
    %c0_15 = arith.constant 0 : index
    %14 = vector.load %arg7[%c0_14, %c0_15] : memref<1x128xf32, #tpu.memory_space<vmem>>, vector<1x128xf32>
    %15 = vector.broadcast %14 : vector<1x128xf32> to vector<128x128xf32>
    %16 = arith.addf %13, %15 : vector<128x128xf32>
    %cst_16 = arith.constant 0.000000e+00 : f32
    %17 = vector.broadcast %cst_16 : f32 to vector<128x128xf32>
    %18 = arith.maximumf %16, %17 : vector<128x128xf32>
    %c0_17 = arith.constant 0 : index
    %c0_18 = arith.constant 0 : index
    %19 = vector.load %arg8[%c0_17, %c0_18] : memref<128x128xf32, #tpu.memory_space<vmem>>, vector<128x128xf32>
    %cst_19 = arith.constant dense<0.000000e+00> : vector<128x128xf32>
    %20 = tpu.matmul %18, %19, %cst_19 {dimension_numbers = #tpu.dot_dimension_numbers<[1], [0], [0], [1], [0, 0, 1, 1], [], []>} : vector<128x128xf32>, vector<128x128xf32>, vector<128x128xf32> -> vector<128x128xf32>
    %c0_20 = arith.constant 0 : index
    %c0_21 = arith.constant 0 : index
    %21 = vector.load %arg9[%c0_20, %c0_21] : memref<1x128xf32, #tpu.memory_space<vmem>>, vector<1x128xf32>
    %22 = vector.broadcast %21 : vector<1x128xf32> to vector<128x128xf32>
    %23 = arith.addf %20, %22 : vector<128x128xf32>
    %24 = tpu.transpose %23, [1, 0] : vector<128x128xf32> -> vector<128x128xf32>
    %25 = vector.extract_strided_slice %24 {offsets = [0, 0], sizes = [1, 128], strides = [1, 1]} : vector<128x128xf32> to vector<1x128xf32>
    %c0_22 = arith.constant 0 : index
    %c0_23 = arith.constant 0 : index
    %26 = vector.load %arg10[%c0_22, %c0_23] : memref<1x128xf32, #tpu.memory_space<vmem>>, vector<1x128xf32>
    tpu.vector_store %arg10[%c0_22, %c0_23], %25 {strides = array<i32>} : memref<1x128xf32, #tpu.memory_space<vmem>>, vector<1x128xf32>,
    return
  }
  func.func @transform_0(%arg0: i32) -> (i32, i32) {
    %c0_i32 = arith.constant 0 : i32
    %c0_i32_0 = arith.constant 0 : i32
    return %arg0, %c0_i32 : i32, i32
  }
  func.func @transform_1(%arg0: i32) -> (i32, i32) {
    %c0_i32 = arith.constant 0 : i32
    %c0_i32_0 = arith.constant 0 : i32
    return %arg0, %c0_i32 : i32, i32
  }
  func.func @transform_2(%arg0: i32) -> (i32, i32) {
    %c0_i32 = arith.constant 0 : i32
    %c0_i32_0 = arith.constant 0 : i32
    %c0_i32_1 = arith.constant 0 : i32
    return %c0_i32, %c0_i32_0 : i32, i32
  }
  func.func @transform_3(%arg0: i32) -> (i32, i32) {
    %c0_i32 = arith.constant 0 : i32
    %c0_i32_0 = arith.constant 0 : i32
    %c0_i32_1 = arith.constant 0 : i32
    return %c0_i32, %c0_i32_0 : i32, i32
  }
  func.func @transform_4(%arg0: i32) -> (i32, i32) {
    %c0_i32 = arith.constant 0 : i32
    %c0_i32_0 = arith.constant 0 : i32
    %c0_i32_1 = arith.constant 0 : i32
    return %c0_i32, %c0_i32_0 : i32, i32
  }
  func.func @transform_5(%arg0: i32) -> (i32, i32) {
    %c0_i32 = arith.constant 0 : i32
    %c0_i32_0 = arith.constant 0 : i32
    %c0_i32_1 = arith.constant 0 : i32
    return %c0_i32, %c0_i32_0 : i32, i32
  }
  func.func @transform_6(%arg0: i32) -> (i32, i32) {
    %c0_i32 = arith.constant 0 : i32
    %c0_i32_0 = arith.constant 0 : i32
    %c0_i32_1 = arith.constant 0 : i32
    return %c0_i32, %c0_i32_0 : i32, i32
  }
  func.func @transform_7(%arg0: i32) -> (i32, i32) {
    %c0_i32 = arith.constant 0 : i32
    %c0_i32_0 = arith.constant 0 : i32
    %c0_i32_1 = arith.constant 0 : i32
    return %c0_i32, %c0_i32_0 : i32, i32
  }
  func.func @transform_8(%arg0: i32) -> (i32, i32) {
    %c0_i32 = arith.constant 0 : i32
    %c0_i32_0 = arith.constant 0 : i32
    %c0_i32_1 = arith.constant 0 : i32
    return %c0_i32, %c0_i32_0 : i32, i32
  }
  func.func @transform_9(%arg0: i32) -> (i32, i32) {
    %c0_i32 = arith.constant 0 : i32
    %c0_i32_0 = arith.constant 0 : i32
    return %c0_i32, %arg0 : i32, i32
  }
}

</mosaic_0001>

<llo_original>
// kernel: tpu_custom_call.1
$region0: #{tpu_custom_call.1}
  #allocation0 [shape = 'u32[]', space=smem, size = 0x4, offset = 0x4, fixed_abs, tag = 'smem constant byte address 0x4 - core index']
  #allocation1 [shape = 'u32[72,128]{1,0:T(1,128)}', space=vmem, size = 0x9000, scoped, tag = 'internal scratch']
  %s0 = inlined_call_operand.vmem [shape: f32[128,8], index: 0, kind: input, shape index: {}]
  %s1 = inlined_call_operand.vmem [shape: f32[128,4], index: 1, kind: input, shape index: {}]
  %s2 = inlined_call_operand.vmem [shape: f32[8,128], index: 2, kind: input, shape index: {}]
  %s3 = inlined_call_operand.vmem [shape: f32[4,128], index: 3, kind: input, shape index: {}]
  %s4 = inlined_call_operand.vmem [shape: f32[1,128], index: 4, kind: input, shape index: {}]
  %s5 = inlined_call_operand.vmem [shape: f32[128,128], index: 5, kind: input, shape index: {}]
  %s6 = inlined_call_operand.vmem [shape: f32[1,128], index: 6, kind: input, shape index: {}]
  %s7 = inlined_call_operand.vmem [shape: f32[128,128], index: 7, kind: input, shape index: {}]
  %s8 = inlined_call_operand.vmem [shape: f32[1,128], index: 8, kind: input, shape index: {}]
  %s9 = inlined_call_operand.hbm [shape: f32[1,128], index: 9, kind: output, shape index: {}]
  %s10 = sld [smem:[#allocation0]]
  $region46: #{tpu_custom_call.1} parent=0
    _
  %s12 = ssub.s32 1, %s10
  %s13 = scalar_select 0, %s12, %s10
  $region1: #{tpu_custom_call.1} parent=0
    #allocation2 [shape = 'u8[512]{0}', space=vmem, size = 0x400, scoped, tag = 'output window, operand 0, single buffered']
    #allocation3 [shape = 's32[1]{0}', space=sflag, size = 0x4, scoped, tag = 'scoped memory for tpu_custom_call.1']
    %14 = vsyncpa [#allocation3], 0
    // Predicated region
    $region2: #{tpu_custom_call.1} parent=1 // pred_check
      _
    $region3: #{tpu_custom_call.1} parent=1 // pred_check_branch
      %16 = sbr.rel (0) target = $region5
    $region4: #{tpu_custom_call.1} parent=1 // pred_region
      _
    $region5: #{tpu_custom_call.1} parent=1 // pred_fallthru
      _
    // Predicated region
    $region6: #{tpu_custom_call.1} parent=1 // pred_check
      _
    $region7: #{tpu_custom_call.1} parent=1 // pred_check_branch
      %18 = sbr.rel (0) target = $region9
    $region8: #{tpu_custom_call.1} parent=1 // pred_region
      _
    $region9: #{tpu_custom_call.1} parent=1 // pred_fallthru
      _
    // Predicated region
    $region10: #{tpu_custom_call.1} parent=1 // pred_check
      _
    $region11: #{tpu_custom_call.1} parent=1 // pred_check_branch
      %20 = sbr.rel (0) target = $region13
    $region12: #{tpu_custom_call.1} parent=1 // pred_region
      _
    $region13: #{tpu_custom_call.1} parent=1 // pred_fallthru
      _
    // Predicated region
    $region14: #{tpu_custom_call.1} parent=1 // pred_check
      _
    $region15: #{tpu_custom_call.1} parent=1 // pred_check_branch
      %22 = sbr.rel (0) target = $region17
    $region16: #{tpu_custom_call.1} parent=1 // pred_region
      _
    $region17: #{tpu_custom_call.1} parent=1 // pred_fallthru
      _
    // Predicated region
    $region18: #{tpu_custom_call.1} parent=1 // pred_check
      _
    $region19: #{tpu_custom_call.1} parent=1 // pred_check_branch
      %24 = sbr.rel (0) target = $region21
    $region20: #{tpu_custom_call.1} parent=1 // pred_region
      _
    $region21: #{tpu_custom_call.1} parent=1 // pred_fallthru
      _
    // Predicated region
    $region22: #{tpu_custom_call.1} parent=1 // pred_check
      _
    $region23: #{tpu_custom_call.1} parent=1 // pred_check_branch
      %26 = sbr.rel (0) target = $region25
    $region24: #{tpu_custom_call.1} parent=1 // pred_region
      _
    $region25: #{tpu_custom_call.1} parent=1 // pred_fallthru
      _
    // Predicated region
    $region26: #{tpu_custom_call.1} parent=1 // pred_check
      _
    $region27: #{tpu_custom_call.1} parent=1 // pred_check_branch
      %28 = sbr.rel (0) target = $region29
    $region28: #{tpu_custom_call.1} parent=1 // pred_region
      _
    $region29: #{tpu_custom_call.1} parent=1 // pred_fallthru
      _
    // Predicated region
    $region30: #{tpu_custom_call.1} parent=1 // pred_check
      _
    $region31: #{tpu_custom_call.1} parent=1 // pred_check_branch
      %30 = sbr.rel (0) target = $region33
    $region32: #{tpu_custom_call.1} parent=1 // pred_region
      _
    $region33: #{tpu_custom_call.1} parent=1 // pred_fallthru
      _
    // Predicated region
    $region34: #{tpu_custom_call.1} parent=1 // pred_check
      _
    $region35: #{tpu_custom_call.1} parent=1 // pred_check_branch
      %32 = sbr.rel (0) target = $region37
    $region36: #{tpu_custom_call.1} parent=1 // pred_region
      _
    $region37: #{tpu_custom_call.1} parent=1 // pred_fallthru
      _
    %v33 = vld [vmem:[%s0] sm:$0xff]
    %v34 = vld [vmem:[%s0 + $0x8] sm:$0xff]
    %v35 = vld [vmem:[%s0 + $0x10] sm:$0xff]
    %v36 = vld [vmem:[%s0 + $0x18] sm:$0xff]
    %v37 = vld [vmem:[%s0 + $0x20] sm:$0xff]
    %v38 = vld [vmem:[%s0 + $0x28] sm:$0xff]
    %v39 = vld [vmem:[%s0 + $0x30] sm:$0xff]
    %v40 = vld [vmem:[%s0 + $0x38] sm:$0xff]
    %v41 = vld [vmem:[%s0 + $0x40] sm:$0xff]
    %v42 = vld [vmem:[%s0 + $0x48] sm:$0xff]
    %v43 = vld [vmem:[%s0 + $0x50] sm:$0xff]
    %v44 = vld [vmem:[%s0 + $0x58] sm:$0xff]
    %v45 = vld [vmem:[%s0 + $0x60] sm:$0xff]
    %v46 = vld [vmem:[%s0 + $0x68] sm:$0xff]
    %v47 = vld [vmem:[%s0 + $0x70] sm:$0xff]
    %v48 = vld [vmem:[%s0 + $0x78] sm:$0xff]
    %v49 = vld [vmem:[%s1] sm:$0xff]
    %v50 = vld [vmem:[%s1 + $0x8] sm:$0xff]
    %v51 = vld [vmem:[%s1 + $0x10] sm:$0xff]
    %v52 = vld [vmem:[%s1 + $0x18] sm:$0xff]
    %v53 = vld [vmem:[%s1 + $0x20] sm:$0xff]
    %v54 = vld [vmem:[%s1 + $0x28] sm:$0xff]
    %v55 = vld [vmem:[%s1 + $0x30] sm:$0xff]
    %v56 = vld [vmem:[%s1 + $0x38] sm:$0xff]
    %v57 = vld [vmem:[%s1 + $0x40] sm:$0xff]
    %v58 = vld [vmem:[%s1 + $0x48] sm:$0xff]
    %v59 = vld [vmem:[%s1 + $0x50] sm:$0xff]
    %v60 = vld [vmem:[%s1 + $0x58] sm:$0xff]
    %v61 = vld [vmem:[%s1 + $0x60] sm:$0xff]
    %v62 = vld [vmem:[%s1 + $0x68] sm:$0xff]
    %v63 = vld [vmem:[%s1 + $0x70] sm:$0xff]
    %v64 = vld [vmem:[%s1 + $0x78] sm:$0xff]
    %v65 = vld [vmem:[%s2] sm:$0xff]
    %v66 = vld [vmem:[%s3] sm:$0xf]
    %vm67 = vcmask 31744
    %v69 = vsel %vm67, %v49, 0
    %v72 = vsel %vm67, %v50, 0
    %v75 = vsel %vm67, %v51, 0
    %v78 = vsel %vm67, %v52, 0
    %v81 = vsel %vm67, %v53, 0
    %v84 = vsel %vm67, %v54, 0
    %v87 = vsel %vm67, %v55, 0
    %v90 = vsel %vm67, %v56, 0
    %v93 = vsel %vm67, %v57, 0
    %v96 = vsel %vm67, %v58, 0
    %v99 = vsel %vm67, %v59, 0
    %v102 = vsel %vm67, %v60, 0
    %v105 = vsel %vm67, %v61, 0
    %v108 = vsel %vm67, %v62, 0
    %v111 = vsel %vm67, %v63, 0
    %v114 = vsel %vm67, %v64, 0
    %vm116 = vcmask 1043456
    %v118 = vsel %vm116, %v66, 0
    %120 = vmatpush.msra.mxu0 0.0
    %121 = vmatpush.msra.mxu0 0.0
    %122 = vmatpush.msra.mxu0 0.0
    %123 = vmatpush.msra.mxu0 0.0
    %124 = vmatpush.msra.mxu0 0.0
    %125 = vmatpush.msra.mxu0 0.0
    %126 = vmatpush.msra.mxu0 0.0
    %127 = vmatpush.msra.mxu0 0.0
    %128 = vmatpush.msra.mxu0 0.0
    %129 = vmatpush.msra.mxu0 0.0
    %130 = vmatpush.msra.mxu0 0.0
    %131 = vmatpush.msra.mxu0 0.0
    %132 = vmatpush.msra.mxu0 0.0
    %133 = vmatpush.msra.mxu0 0.0
    %134 = vmatpush.msra.mxu0 0.0
    %135 = vmatpush.msra.mxu0 %v118
    %136 = vmatmul.f32.gmra.mxu0 %v69
    %v137 = vpop.f32.mrf.mxu0
    %v138 = vadd.f32 0.0, %v137
    %139 = vmatmul.f32.gmra.mxu0 %v72
    %v140 = vpop.f32.mrf.mxu0
    %v141 = vadd.f32 0.0, %v140
    %142 = vmatmul.f32.gmra.mxu0 %v75
    %v143 = vpop.f32.mrf.mxu0
    %v144 = vadd.f32 0.0, %v143
    %145 = vmatmul.f32.gmra.mxu0 %v78
    %v146 = vpop.f32.mrf.mxu0
    %v147 = vadd.f32 0.0, %v146
    %148 = vmatmul.f32.gmra.mxu0 %v81
    %v149 = vpop.f32.mrf.mxu0
    %v150 = vadd.f32 0.0, %v149
    %151 = vmatmul.f32.gmra.mxu0 %v84
    %v152 = vpop.f32.mrf.mxu0
    %v153 = vadd.f32 0.0, %v152
    %154 = vmatmul.f32.gmra.mxu0 %v87
    %v155 = vpop.f32.mrf.mxu0
    %v156 = vadd.f32 0.0, %v155
    %157 = vmatmul.f32.gmra.mxu0 %v90
    %v158 = vpop.f32.mrf.mxu0
    %v159 = vadd.f32 0.0, %v158
    %160 = vmatmul.f32.gmra.mxu0 %v93
    %v161 = vpop.f32.mrf.mxu0
    %v162 = vadd.f32 0.0, %v161
    %163 = vmatmul.f32.gmra.mxu0 %v96
    %v164 = vpop.f32.mrf.mxu0
    %v165 = vadd.f32 0.0, %v164
    %166 = vmatmul.f32.gmra.mxu0 %v99
    %v167 = vpop.f32.mrf.mxu0
    %v168 = vadd.f32 0.0, %v167
    %169 = vmatmul.f32.gmra.mxu0 %v102
    %v170 = vpop.f32.mrf.mxu0
    %v171 = vadd.f32 0.0, %v170
    %172 = vmatmul.f32.gmra.mxu0 %v105
    %v173 = vpop.f32.mrf.mxu0
    %v174 = vadd.f32 0.0, %v173
    %175 = vmatmul.f32.gmra.mxu0 %v108
    %v176 = vpop.f32.mrf.mxu0
    %v177 = vadd.f32 0.0, %v176
    %178 = vmatmul.f32.gmra.mxu0 %v111
    %v179 = vpop.f32.mrf.mxu0
    %v180 = vadd.f32 0.0, %v179
    %181 = vmatmul.f32.gmra.mxu0 %v114
    %v182 = vpop.f32.mrf.mxu0
    %v183 = vadd.f32 0.0, %v182
    %184 = vdwg.mxu0
    %vm185 = vcmask 64512
    %v187 = vsel %vm185, %v33, 0
    %v190 = vsel %vm185, %v34, 0
    %v193 = vsel %vm185, %v35, 0
    %v196 = vsel %vm185, %v36, 0
    %v199 = vsel %vm185, %v37, 0
    %v202 = vsel %vm185, %v38, 0
    %v205 = vsel %vm185, %v39, 0
    %v208 = vsel %vm185, %v40, 0
    %v211 = vsel %vm185, %v41, 0
    %v214 = vsel %vm185, %v42, 0
    %v217 = vsel %vm185, %v43, 0
    %v220 = vsel %vm185, %v44, 0
    %v223 = vsel %vm185, %v45, 0
    %v226 = vsel %vm185, %v46, 0
    %v229 = vsel %vm185, %v47, 0
    %v232 = vsel %vm185, %v48, 0
    %234 = vmatpush.msra.mxu0 0.0
    %235 = vmatpush.msra.mxu0 0.0
    %236 = vmatpush.msra.mxu0 0.0
    %237 = vmatpush.msra.mxu0 0.0
    %238 = vmatpush.msra.mxu0 0.0
    %239 = vmatpush.msra.mxu0 0.0
    %240 = vmatpush.msra.mxu0 0.0
    %241 = vmatpush.msra.mxu0 0.0
    %242 = vmatpush.msra.mxu0 0.0
    %243 = vmatpush.msra.mxu0 0.0
    %244 = vmatpush.msra.mxu0 0.0
    %245 = vmatpush.msra.mxu0 0.0
    %246 = vmatpush.msra.mxu0 0.0
    %247 = vmatpush.msra.mxu0 0.0
    %248 = vmatpush.msra.mxu0 0.0
    %249 = vmatpush.msra.mxu0 %v65
    %250 = vmatmul.f32.gmra.mxu0 %v187
    %v251 = vpop.f32.mrf.mxu0
    %v252 = vadd.f32 %v138, %v251
    %253 = vmatmul.f32.gmra.mxu0 %v190
    %v254 = vpop.f32.mrf.mxu0
    %v255 = vadd.f32 %v141, %v254
    %256 = vmatmul.f32.gmra.mxu0 %v193
    %v257 = vpop.f32.mrf.mxu0
    %v258 = vadd.f32 %v144, %v257
    %259 = vmatmul.f32.gmra.mxu0 %v196
    %v260 = vpop.f32.mrf.mxu0
    %v261 = vadd.f32 %v147, %v260
    %262 = vmatmul.f32.gmra.mxu0 %v199
    %v263 = vpop.f32.mrf.mxu0
    %v264 = vadd.f32 %v150, %v263
    %265 = vmatmul.f32.gmra.mxu0 %v202
    %v266 = vpop.f32.mrf.mxu0
    %v267 = vadd.f32 %v153, %v266
    %268 = vmatmul.f32.gmra.mxu0 %v205
    %v269 = vpop.f32.mrf.mxu0
    %v270 = vadd.f32 %v156, %v269
    %271 = vmatmul.f32.gmra.mxu0 %v208
    %v272 = vpop.f32.mrf.mxu0
    %v273 = vadd.f32 %v159, %v272
    %274 = vmatmul.f32.gmra.mxu0 %v211
    %v275 = vpop.f32.mrf.mxu0
    %v276 = vadd.f32 %v162, %v275
    %277 = vmatmul.f32.gmra.mxu0 %v214
    %v278 = vpop.f32.mrf.mxu0
    %v279 = vadd.f32 %v165, %v278
    %280 = vmatmul.f32.gmra.mxu0 %v217
    %v281 = vpop.f32.mrf.mxu0
    %v282 = vadd.f32 %v168, %v281
    %283 = vmatmul.f32.gmra.mxu0 %v220
    %v284 = vpop.f32.mrf.mxu0
    %v285 = vadd.f32 %v171, %v284
    %286 = vmatmul.f32.gmra.mxu0 %v223
    %v287 = vpop.f32.mrf.mxu0
    %v288 = vadd.f32 %v174, %v287
    %289 = vmatmul.f32.gmra.mxu0 %v226
    %v290 = vpop.f32.mrf.mxu0
    %v291 = vadd.f32 %v177, %v290
    %292 = vmatmul.f32.gmra.mxu0 %v229
    %v293 = vpop.f32.mrf.mxu0
    %v294 = vadd.f32 %v180, %v293
    %295 = vmatmul.f32.gmra.mxu0 %v232
    %v296 = vpop.f32.mrf.mxu0
    %v297 = vadd.f32 %v183, %v296
    %298 = vdwg.mxu0
    %v299 = vld [vmem:[%s4] sm:$0x1]
    %v301 = vperm.slane %v299, 0
    %v303 = vadd.f32 %v252, %v301
    %v304 = vadd.f32 %v255, %v301
    %v305 = vadd.f32 %v258, %v301
    %v306 = vadd.f32 %v261, %v301
    %v307 = vadd.f32 %v264, %v301
    %v308 = vadd.f32 %v267, %v301
    %v309 = vadd.f32 %v270, %v301
    %v310 = vadd.f32 %v273, %v301
    %v311 = vadd.f32 %v276, %v301
    %v312 = vadd.f32 %v279, %v301
    %v313 = vadd.f32 %v282, %v301
    %v314 = vadd.f32 %v285, %v301
    %v315 = vadd.f32 %v288, %v301
    %v316 = vadd.f32 %v291, %v301
    %v317 = vadd.f32 %v294, %v301
    %v318 = vadd.f32 %v297, %v301
    %v319 = vmax.f32 %v303, 0.0
    %v320 = vmax.f32 %v304, 0.0
    %v321 = vmax.f32 %v305, 0.0
    %v322 = vmax.f32 %v306, 0.0
    %v323 = vmax.f32 %v307, 0.0
    %v324 = vmax.f32 %v308, 0.0
    %v325 = vmax.f32 %v309, 0.0
    %v326 = vmax.f32 %v310, 0.0
    %v327 = vmax.f32 %v311, 0.0
    %v328 = vmax.f32 %v312, 0.0
    %v329 = vmax.f32 %v313, 0.0
    %v330 = vmax.f32 %v314, 0.0
    %v331 = vmax.f32 %v315, 0.0
    %v332 = vmax.f32 %v316, 0.0
    %v333 = vmax.f32 %v317, 0.0
    %v334 = vmax.f32 %v318, 0.0
    %v335 = vld [vmem:[%s5] sm:$0xff]
    %v336 = vld [vmem:[%s5 + $0x8] sm:$0xff]
    %v337 = vld [vmem:[%s5 + $0x10] sm:$0xff]
    %v338 = vld [vmem:[%s5 + $0x18] sm:$0xff]
    %v339 = vld [vmem:[%s5 + $0x20] sm:$0xff]
    %v340 = vld [vmem:[%s5 + $0x28] sm:$0xff]
    %v341 = vld [vmem:[%s5 + $0x30] sm:$0xff]
    %v342 = vld [vmem:[%s5 + $0x38] sm:$0xff]
    %v343 = vld [vmem:[%s5 + $0x40] sm:$0xff]
    %v344 = vld [vmem:[%s5 + $0x48] sm:$0xff]
    %v345 = vld [vmem:[%s5 + $0x50] sm:$0xff]
    %v346 = vld [vmem:[%s5 + $0x58] sm:$0xff]
    %v347 = vld [vmem:[%s5 + $0x60] sm:$0xff]
    %v348 = vld [vmem:[%s5 + $0x68] sm:$0xff]
    %v349 = vld [vmem:[%s5 + $0x70] sm:$0xff]
    %v350 = vld [vmem:[%s5 + $0x78] sm:$0xff]
    %v351 = vld [vmem:[%s6] sm:$0x1]
    %v353 = vperm.slane %v351, 0
    %355 = vmatpush.msra.mxu0 %v350
    %356 = vmatpush.msra.mxu0 %v349
    %357 = vmatpush.msra.mxu0 %v348
    %358 = vmatpush.msra.mxu0 %v347
    %359 = vmatpush.msra.mxu0 %v346
    %360 = vmatpush.msra.mxu0 %v345
    %361 = vmatpush.msra.mxu0 %v344
    %362 = vmatpush.msra.mxu0 %v343
    %363 = vmatpush.msra.mxu0 %v342
    %364 = vmatpush.msra.mxu0 %v341
    %365 = vmatpush.msra.mxu0 %v340
    %366 = vmatpush.msra.mxu0 %v339
    %367 = vmatpush.msra.mxu0 %v338
    %368 = vmatpush.msra.mxu0 %v337
    %369 = vmatpush.msra.mxu0 %v336
    %370 = vmatpush.msra.mxu0 %v335
    %371 = vmatmul.f32.gmra.mxu0 %v319
    %v372 = vpop.f32.mrf.mxu0
    %v373 = vadd.f32 %v353, %v372
    %374 = vmatmul.f32.gmra.mxu0 %v320
    %v375 = vpop.f32.mrf.mxu0
    %v376 = vadd.f32 %v353, %v375
    %377 = vmatmul.f32.gmra.mxu0 %v321
    %v378 = vpop.f32.mrf.mxu0
    %v379 = vadd.f32 %v353, %v378
    %380 = vmatmul.f32.gmra.mxu0 %v322
    %v381 = vpop.f32.mrf.mxu0
    %v382 = vadd.f32 %v353, %v381
    %383 = vmatmul.f32.gmra.mxu0 %v323
    %v384 = vpop.f32.mrf.mxu0
    %v385 = vadd.f32 %v353, %v384
    %386 = vmatmul.f32.gmra.mxu0 %v324
    %v387 = vpop.f32.mrf.mxu0
    %v388 = vadd.f32 %v353, %v387
    %389 = vmatmul.f32.gmra.mxu0 %v325
    %v390 = vpop.f32.mrf.mxu0
    %v391 = vadd.f32 %v353, %v390
    %392 = vmatmul.f32.gmra.mxu0 %v326
    %v393 = vpop.f32.mrf.mxu0
    %v394 = vadd.f32 %v353, %v393
    %395 = vmatmul.f32.gmra.mxu0 %v327
    %v396 = vpop.f32.mrf.mxu0
    %v397 = vadd.f32 %v353, %v396
    %398 = vmatmul.f32.gmra.mxu0 %v328
    %v399 = vpop.f32.mrf.mxu0
    %v400 = vadd.f32 %v353, %v399
    %401 = vmatmul.f32.gmra.mxu0 %v329
    %v402 = vpop.f32.mrf.mxu0
    %v403 = vadd.f32 %v353, %v402
    %404 = vmatmul.f32.gmra.mxu0 %v330
    %v405 = vpop.f32.mrf.mxu0
    %v406 = vadd.f32 %v353, %v405
    %407 = vmatmul.f32.gmra.mxu0 %v331
    %v408 = vpop.f32.mrf.mxu0
    %v409 = vadd.f32 %v353, %v408
    %410 = vmatmul.f32.gmra.mxu0 %v332
    %v411 = vpop.f32.mrf.mxu0
    %v412 = vadd.f32 %v353, %v411
    %413 = vmatmul.f32.gmra.mxu0 %v333
    %v414 = vpop.f32.mrf.mxu0
    %v415 = vadd.f32 %v353, %v414
    %416 = vmatmul.f32.gmra.mxu0 %v334
    %v417 = vpop.f32.mrf.mxu0
    %v418 = vadd.f32 %v353, %v417
    %419 = vdwg.mxu0
    %v420 = vmax.f32 %v373, 0.0
    %v421 = vmax.f32 %v376, 0.0
    %v422 = vmax.f32 %v379, 0.0
    %v423 = vmax.f32 %v382, 0.0
    %v424 = vmax.f32 %v385, 0.0
    %v425 = vmax.f32 %v388, 0.0
    %v426 = vmax.f32 %v391, 0.0
    %v427 = vmax.f32 %v394, 0.0
    %v428 = vmax.f32 %v397, 0.0
    %v429 = vmax.f32 %v400, 0.0
    %v430 = vmax.f32 %v403, 0.0
    %v431 = vmax.f32 %v406, 0.0
    %v432 = vmax.f32 %v409, 0.0
    %v433 = vmax.f32 %v412, 0.0
    %v434 = vmax.f32 %v415, 0.0
    %v435 = vmax.f32 %v418, 0.0
    %v436 = vld [vmem:[%s7] sm:$0xff]
    %v437 = vld [vmem:[%s7 + $0x8] sm:$0xff]
    %v438 = vld [vmem:[%s7 + $0x10] sm:$0xff]
    %v439 = vld [vmem:[%s7 + $0x18] sm:$0xff]
    %v440 = vld [vmem:[%s7 + $0x20] sm:$0xff]
    %v441 = vld [vmem:[%s7 + $0x28] sm:$0xff]
    %v442 = vld [vmem:[%s7 + $0x30] sm:$0xff]
    %v443 = vld [vmem:[%s7 + $0x38] sm:$0xff]
    %v444 = vld [vmem:[%s7 + $0x40] sm:$0xff]
    %v445 = vld [vmem:[%s7 + $0x48] sm:$0xff]
    %v446 = vld [vmem:[%s7 + $0x50] sm:$0xff]
    %v447 = vld [vmem:[%s7 + $0x58] sm:$0xff]
    %v448 = vld [vmem:[%s7 + $0x60] sm:$0xff]
    %v449 = vld [vmem:[%s7 + $0x68] sm:$0xff]
    %v450 = vld [vmem:[%s7 + $0x70] sm:$0xff]
    %v451 = vld [vmem:[%s7 + $0x78] sm:$0xff]
    %v452 = vld [vmem:[%s8] sm:$0x1]
    %v454 = vperm.slane %v452, 0
    %456 = vmatpush.msra.mxu0 %v451
    %457 = vmatpush.msra.mxu0 %v450
    %458 = vmatpush.msra.mxu0 %v449
    %459 = vmatpush.msra.mxu0 %v448
    %460 = vmatpush.msra.mxu0 %v447
    %461 = vmatpush.msra.mxu0 %v446
    %462 = vmatpush.msra.mxu0 %v445
    %463 = vmatpush.msra.mxu0 %v444
    %464 = vmatpush.msra.mxu0 %v443
    %465 = vmatpush.msra.mxu0 %v442
    %466 = vmatpush.msra.mxu0 %v441
    %467 = vmatpush.msra.mxu0 %v440
    %468 = vmatpush.msra.mxu0 %v439
    %469 = vmatpush.msra.mxu0 %v438
    %470 = vmatpush.msra.mxu0 %v437
    %471 = vmatpush.msra.mxu0 %v436
    %472 = vmatmul.f32.gmra.mxu0 %v420
    %v473 = vpop.f32.mrf.mxu0
    %v474 = vadd.f32 %v454, %v473
    %475 = vmatmul.f32.gmra.mxu0 %v421
    %v476 = vpop.f32.mrf.mxu0
    %v477 = vadd.f32 %v454, %v476
    %478 = vmatmul.f32.gmra.mxu0 %v422
    %v479 = vpop.f32.mrf.mxu0
    %v480 = vadd.f32 %v454, %v479
    %481 = vmatmul.f32.gmra.mxu0 %v423
    %v482 = vpop.f32.mrf.mxu0
    %v483 = vadd.f32 %v454, %v482
    %484 = vmatmul.f32.gmra.mxu0 %v424
    %v485 = vpop.f32.mrf.mxu0
    %v486 = vadd.f32 %v454, %v485
    %487 = vmatmul.f32.gmra.mxu0 %v425
    %v488 = vpop.f32.mrf.mxu0
    %v489 = vadd.f32 %v454, %v488
    %490 = vmatmul.f32.gmra.mxu0 %v426
    %v491 = vpop.f32.mrf.mxu0
    %v492 = vadd.f32 %v454, %v491
    %493 = vmatmul.f32.gmra.mxu0 %v427
    %v494 = vpop.f32.mrf.mxu0
    %v495 = vadd.f32 %v454, %v494
    %496 = vmatmul.f32.gmra.mxu0 %v428
    %v497 = vpop.f32.mrf.mxu0
    %v498 = vadd.f32 %v454, %v497
    %499 = vmatmul.f32.gmra.mxu0 %v429
    %v500 = vpop.f32.mrf.mxu0
    %v501 = vadd.f32 %v454, %v500
    %502 = vmatmul.f32.gmra.mxu0 %v430
    %v503 = vpop.f32.mrf.mxu0
    %v504 = vadd.f32 %v454, %v503
    %505 = vmatmul.f32.gmra.mxu0 %v431
    %v506 = vpop.f32.mrf.mxu0
    %v507 = vadd.f32 %v454, %v506
    %508 = vmatmul.f32.gmra.mxu0 %v432
    %v509 = vpop.f32.mrf.mxu0
    %v510 = vadd.f32 %v454, %v509
    %511 = vmatmul.f32.gmra.mxu0 %v433
    %v512 = vpop.f32.mrf.mxu0
    %v513 = vadd.f32 %v454, %v512
    %514 = vmatmul.f32.gmra.mxu0 %v434
    %v515 = vpop.f32.mrf.mxu0
    %v516 = vadd.f32 %v454, %v515
    %517 = vmatmul.f32.gmra.mxu0 %v435
    %v518 = vpop.f32.mrf.mxu0
    %v519 = vadd.f32 %v454, %v518
    %520 = vdwg.mxu0
    %521 = vxpose.xlu0.b32.start [1/16] %v474, 128
    %522 = vxpose.xlu0.b32.cont [2/16] %v477, 128
    %523 = vxpose.xlu0.b32.cont [3/16] %v480, 128
    %524 = vxpose.xlu0.b32.cont [4/16] %v483, 128
    %525 = vxpose.xlu0.b32.cont [5/16] %v486, 128
    %526 = vxpose.xlu0.b32.cont [6/16] %v489, 128
    %527 = vxpose.xlu0.b32.cont [7/16] %v492, 128
    %528 = vxpose.xlu0.b32.cont [8/16] %v495, 128
    %529 = vxpose.xlu0.b32.cont [9/16] %v498, 128
    %530 = vxpose.xlu0.b32.cont [10/16] %v501, 128
    %531 = vxpose.xlu0.b32.cont [11/16] %v504, 128
    %532 = vxpose.xlu0.b32.cont [12/16] %v507, 128
    %533 = vxpose.xlu0.b32.cont [13/16] %v510, 128
    %534 = vxpose.xlu0.b32.cont [14/16] %v513, 128
    %535 = vxpose.xlu0.b32.cont [15/16] %v516, 128
    %536 = vxpose.xlu0.b32.end [16/16] %v519, 128
    %v537 = vpop.trf.xlu0
    %v538 = vpop.trf.xlu0
    %v539 = vpop.trf.xlu0
    %v540 = vpop.trf.xlu0
    %v541 = vpop.trf.xlu0
    %v542 = vpop.trf.xlu0
    %v543 = vpop.trf.xlu0
    %v544 = vpop.trf.xlu0
    %v545 = vpop.trf.xlu0
    %v546 = vpop.trf.xlu0
    %v547 = vpop.trf.xlu0
    %v548 = vpop.trf.xlu0
    %v549 = vpop.trf.xlu0
    %v550 = vpop.trf.xlu0
    %v551 = vpop.trf.xlu0
    %v552 = vpop.trf.xlu0
    %553 = vst [vmem:[#allocation2] sm:$0x1] %v537
    // Predicated region
    $region38: #{tpu_custom_call.1} parent=1 // pred_check
      _
    $region39: #{tpu_custom_call.1} parent=1 // pred_check_branch
      %555 = sbr.rel (0) target = $region41
    $region40: #{tpu_custom_call.1} parent=1 // pred_region
      %557 = vsyncadd [#allocation3], 0
      %s559 = sshll.u32 [#allocation2], 4
      %s560 = int_to_ptr.vmem [resolvable:$true] %s559
      %s561 = sshll.u32 %s9, 4
      %s562 = int_to_ptr.hbm [resolvable:$true] %s561
      %564 = dma.vmem_to_hbm [thread:$0]  %s560, 16, %s562, [#allocation3]
    $region41: #{tpu_custom_call.1} parent=1 // pred_fallthru
      _
    // Predicated region
    $region42: #{tpu_custom_call.1} parent=1 // pred_check
      _
    $region43: #{tpu_custom_call.1} parent=1 // pred_check_branch
      %566 = sbr.rel (0) target = $region45
    $region44: #{tpu_custom_call.1} parent=1 // pred_region
      %568 = dma.done [#allocation3], 16
    $region45: #{tpu_custom_call.1} parent=1 // pred_fallthru
      _
    %569 = vsyncpa [#allocation3], 1

</llo_original>
